<compile_context>
chip_gen: v7x
topology: tpu7x:2x2x1
jax: 0.10.0
libtpu: 0.0.40
codegen_flags: <defaults>
</compile_context>

<pallas_src>
import jax
import jax.numpy as jnp
from jax.experimental import pallas as pl
from jax.experimental.pallas import tpu as pltpu

# ---- model dimensions -----------------------------------------------------
L_IN = 56            # input length of both branches
C = 5                # conv out channels
K = 5                # conv kernel size
L1 = L_IN - K + 1    # 52  (after conv1)
P1 = L1 // 2         # 26  (after pool1)
L2 = P1 - K + 1      # 22  (after conv2)
P2 = L2 // 2         # 11  (after pool2)
FEAT1 = C * P2       # 55
FEAT2 = C * P1       # 130
FEAT = FEAT1 + FEAT2 # 185
H = 20
OUT = 4
CL1 = C * L1         # 260 (conv1 output width per branch)
CL2 = C * L2         # 110 (conv2 output width)

# ---- packed-operand layout constants ---------------------------------------
XW = 128             # fused input-slab width: [x1(56) | x2(56) | 1 | zeros]
ONES_COL = 2 * L_IN  # 112 — constant-ones column (bias folding)
BR2_OFF = 384        # branch-2 output columns start at a lane-tile boundary
WCOLS = 768          # packed weight-slab width (multiple of 128)
# row offsets inside the packed weight slab (all multiples of 16 for bf16 tiles)
R_S1 = 0             # fused stage-1 weight      (128, 768)
R_C2 = 128           # pool1 ∘ conv2             (260, 110)
R_F1A = 400          # pool2 ∘ fc1[:, :55]       (110, 20)
R_F1B = 512          # pool  ∘ fc1[:, 55:]       (260, 20)
R_F2 = 784           # fc2 (lane-padded)         (20, 128)
WROWS = 816          # total slab rows (multiple of 16)


# --------------------------------------------------------------------------
# Host-side weight preparation (plain XLA, runs once per weight set)
# --------------------------------------------------------------------------
def _pool_half(length):
    # (length, length//2) matrix implementing AvgPool1d(2, 2) as a matmul.
    rows = jnp.arange(length)[:, None]
    cols = jnp.arange(length // 2)[None, :]
    return ((rows // 2) == cols).astype(jnp.float32) * 0.5


def _conv1_toeplitz(w):
    # Conv1d(in=1, out=C, k=K, valid) as a (L_IN, C*L1) matrix.
    # y[:, c*L1 + t] = sum_k w[c, 0, k] * x[:, t + k]
    c = jnp.arange(C)[:, None, None]
    k = jnp.arange(K)[None, :, None]
    t = jnp.arange(L1)[None, None, :]
    shape = (C, K, L1)
    rows = jnp.broadcast_to(t + k, shape).ravel()
    cols = jnp.broadcast_to(c * L1 + t, shape).ravel()
    vals = jnp.broadcast_to(w[:, 0, :, None], shape).ravel().astype(jnp.float32)
    return jnp.zeros((L_IN, CL1), jnp.float32).at[rows, cols].add(vals)


def _conv2_toeplitz(w):
    # Conv1d(in=C, out=C, k=K, valid) on a (B, C*P1) slab as a (C*P1, C*L2) matrix.
    o = jnp.arange(C)[:, None, None, None]
    ci = jnp.arange(C)[None, :, None, None]
    k = jnp.arange(K)[None, None, :, None]
    t = jnp.arange(L2)[None, None, None, :]
    shape = (C, C, K, L2)
    rows = jnp.broadcast_to(ci * P1 + t + k, shape).ravel()
    cols = jnp.broadcast_to(o * L2 + t, shape).ravel()
    vals = jnp.broadcast_to(w[:, :, :, None], shape).ravel().astype(jnp.float32)
    return jnp.zeros((C * P1, CL2), jnp.float32).at[rows, cols].add(vals)


def prepare_weights(params):
    """Build one packed bf16 weight slab + one f32 bias slab."""
    f32 = jnp.float32
    eye_c = jnp.eye(C, dtype=f32)
    pool_a = jnp.kron(eye_c, _pool_half(L1))   # (260, 130)
    pool_b = jnp.kron(eye_c, _pool_half(L2))   # (110, 55)

    fc1w = params["fc1_w"].T.astype(f32)       # (185, 20)

    # fused stage-1 weight (128, 768): block-diag conv1 Toeplitz + bias row
    t1 = _conv1_toeplitz(params["w1a"])        # branch 1: (56, 260)
    t2 = _conv1_toeplitz(params["w2a"])        # branch 2: (56, 260)
    b1row = jnp.repeat(params["b1a"].astype(f32), L1)   # (260,)
    b2row = jnp.repeat(params["b2a"].astype(f32), L1)   # (260,)
    w_s1 = jnp.zeros((XW, WCOLS), f32)
    w_s1 = w_s1.at[0:L_IN, 0:CL1].set(t1)
    w_s1 = w_s1.at[L_IN:2 * L_IN, BR2_OFF:BR2_OFF + CL1].set(t2)
    w_s1 = w_s1.at[ONES_COL, 0:CL1].set(b1row)
    w_s1 = w_s1.at[ONES_COL, BR2_OFF:BR2_OFF + CL1].set(b2row)

    wc2 = pool_a @ _conv2_toeplitz(params["w1b"])        # (260, 110)
    bc2 = jnp.repeat(params["b1b"].astype(f32), L2)      # (110,)
    wf1a = pool_b @ fc1w[:FEAT1, :]                      # (110, 20)
    wf1b = pool_a @ fc1w[FEAT1:, :]                      # (260, 20)
    wf2_pad = jnp.zeros((H, 128), f32).at[:, :OUT].set(
        params["fc2_w"].T.astype(f32))                   # (20, 128), cols 4: zero

    wslab = jnp.zeros((WROWS, WCOLS), f32)
    wslab = wslab.at[R_S1:R_S1 + XW, :].set(w_s1)
    wslab = wslab.at[R_C2:R_C2 + CL1, 0:CL2].set(wc2)
    wslab = wslab.at[R_F1A:R_F1A + CL2, 0:H].set(wf1a)
    wslab = wslab.at[R_F1B:R_F1B + CL1, 0:H].set(wf1b)
    wslab = wslab.at[R_F2:R_F2 + H, 0:128].set(wf2_pad)
    wslab = wslab.astype(jnp.bfloat16)

    # bias slab (f32): row0 = conv2 bias, row1 = fc1 bias, row2 = padded fc2 bias
    bslab = jnp.zeros((8, 128), f32)
    bslab = bslab.at[0, 0:CL2].set(bc2)
    bslab = bslab.at[1, 0:H].set(params["fc1_b"].astype(f32))
    bslab = bslab.at[2, :].set(-1e30)                    # pad logits -> softmax-ignored
    bslab = bslab.at[2, 0:OUT].set(params["fc2_b"].astype(f32))
    return wslab, bslab


# --------------------------------------------------------------------------
# Pallas kernel
# --------------------------------------------------------------------------
def frist_net_kernel(x_ref, w_ref, b_ref, out_ref):
    f32 = jnp.float32
    bf16 = jnp.bfloat16

    x = x_ref[...]                                                  # (tb, 128) bf16

    # fused stage 1: both conv1 branches + biases in one block-diagonal matmul
    h = jnp.dot(x, w_ref[R_S1:R_S1 + XW, :],
                preferred_element_type=f32)                         # (tb, 768) f32
    h = jnp.maximum(h, 0.0)
    h1 = h[:, 0:CL1].astype(bf16)                                   # branch 1 (tb, 260)
    g1 = h[:, BR2_OFF:BR2_OFF + CL1].astype(bf16)                   # branch 2 (tb, 260)

    # branch 1: (pool1 ∘ conv2) + ReLU   (pool2 folded into wf1a)
    h2 = jnp.dot(h1, w_ref[R_C2:R_C2 + CL1, 0:CL2],
                 preferred_element_type=f32) + b_ref[0:1, 0:CL2]    # (tb, 110)
    h2 = jnp.maximum(h2, 0.0).astype(bf16)

    # fc1 over [out1 | out2]: two dots against the pool-folded weight segments
    z = (jnp.dot(h2, w_ref[R_F1A:R_F1A + CL2, 0:H], preferred_element_type=f32)
         + jnp.dot(g1, w_ref[R_F1B:R_F1B + CL1, 0:H], preferred_element_type=f32)
         + b_ref[1:2, 0:H])                                         # (tb, 20)
    z = jnp.maximum(z, 0.0).astype(bf16)

    # fc2 (lane-padded to 128) + softmax; padding logits are -1e30 -> exp() == 0
    logits = (jnp.dot(z, w_ref[R_F2:R_F2 + H, 0:128],
                      preferred_element_type=f32) + b_ref[2:3, 0:128])
    m = jnp.max(logits, axis=1, keepdims=True)
    e = jnp.exp(logits - m)
    s = jnp.sum(e, axis=1, keepdims=True)
    out_ref[...] = e * pl.reciprocal(s, approx=True)                # (tb, 128) f32


def _choose_tile(bsz):
    # Fixed moderate tile; small batches become one 16-row-aligned block.
    # bsz > 256 always gives grid >= 2 (padding the batch), so both v7x TCs work.
    if bsz <= 256:
        return max(16, ((bsz + 15) // 16) * 16)
    return 256


def frist_net_forward(inputs1, inputs2, params):
    bsz = inputs1.shape[0]
    x1 = inputs1[:, 0, :].astype(jnp.float32)   # squeeze in_channels=1 -> (B, 56)
    x2 = inputs2[:, 0, :].astype(jnp.float32)

    # fused input slab: [x1 | x2 | 1 | zeros] -> (B, 128)
    x = jnp.zeros((bsz, XW), jnp.float32)
    x = x.at[:, 0:L_IN].set(x1)
    x = x.at[:, L_IN:2 * L_IN].set(x2)
    x = x.at[:, ONES_COL].set(1.0)

    tb = _choose_tile(bsz)
    bsz_pad = pl.cdiv(bsz, tb) * tb
    if bsz_pad != bsz:
        x = jnp.pad(x, ((0, bsz_pad - bsz), (0, 0)))
    x = x.astype(jnp.bfloat16)

    wslab, bslab = prepare_weights(params)

    grid = (bsz_pad // tb,)
    xmap = lambda i: (i, 0)     # batch-tiled operands
    wmap = lambda i: (0, 0)     # weights/biases resident across the batch grid

    out = pl.pallas_call(
        frist_net_kernel,
        out_shape=jax.ShapeDtypeStruct((bsz_pad, 128), jnp.float32),
        grid=grid,
        in_specs=[
            pl.BlockSpec((tb, XW), xmap),
            pl.BlockSpec((WROWS, WCOLS), wmap),
            pl.BlockSpec((8, 128), wmap),
        ],
        out_specs=pl.BlockSpec((tb, 128), xmap),
        compiler_params=pltpu.CompilerParams(
            dimension_semantics=("parallel",)),
    )(x, wslab, bslab)

    return out[:bsz, :OUT]


# --------------------------------------------------------------------------
# Pure-JAX reference mirroring the PyTorch module exactly (f32)
# --------------------------------------------------------------------------
def ref_forward(inputs1, inputs2, params):
    def conv1d(x, w, b):
        y = jax.lax.conv_general_dilated(
            x, w, window_strides=(1,), padding="VALID",
            dimension_numbers=("NCH", "OIH", "NCH"))
        return y + b[None, :, None]

    def avgpool(x):
        b, c, l = x.shape
        return x.reshape(b, c, l // 2, 2).mean(-1)

    h = avgpool(jnp.maximum(conv1d(inputs1, params["w1a"], params["b1a"]), 0.0))
    h = avgpool(jnp.maximum(conv1d(h, params["w1b"], params["b1b"]), 0.0))
    o1 = h.reshape(inputs1.shape[0], FEAT1)
    g = avgpool(jnp.maximum(conv1d(inputs2, params["w2a"], params["b2a"]), 0.0))
    o2 = g.reshape(inputs2.shape[0], FEAT2)
    feats = jnp.concatenate([o1, o2], axis=1)
    z = jnp.maximum(feats @ params["fc1_w"].T + params["fc1_b"], 0.0)
    logits = z @ params["fc2_w"].T + params["fc2_b"]
    return jax.nn.softmax(logits, axis=1)


if __name__ == "__main__":
    key = jax.random.PRNGKey(0)
    keys = jax.random.split(key, 12)
    batch = 2

    params = {
        "w1a": 0.3 * jax.random.normal(keys[0], (C, 1, K), jnp.float32),
        "b1a": 0.1 * jax.random.normal(keys[1], (C,), jnp.float32),
        "w1b": 0.3 * jax.random.normal(keys[2], (C, C, K), jnp.float32),
        "b1b": 0.1 * jax.random.normal(keys[3], (C,), jnp.float32),
        "w2a": 0.3 * jax.random.normal(keys[4], (C, 1, K), jnp.float32),
        "b2a": 0.1 * jax.random.normal(keys[5], (C,), jnp.float32),
        "fc1_w": 0.1 * jax.random.normal(keys[6], (H, FEAT), jnp.float32),
        "fc1_b": 0.1 * jax.random.normal(keys[7], (H,), jnp.float32),
        "fc2_w": 0.1 * jax.random.normal(keys[8], (OUT, H), jnp.float32),
        "fc2_b": 0.1 * jax.random.normal(keys[9], (OUT,), jnp.float32),
    }
    inputs1 = jax.random.normal(keys[10], (batch, 1, L_IN), jnp.float32)
    inputs2 = jax.random.normal(keys[11], (batch, 1, L_IN), jnp.float32)

    out = jax.block_until_ready(frist_net_forward(inputs1, inputs2, params))
    ref = ref_forward(inputs1, inputs2, params)

    assert out.shape == (batch, OUT)
    # bf16 MXU path + approx reciprocal vs f32 reference -> loosened tolerance.
    max_err = float(jnp.max(jnp.abs(out - ref)))
    assert bool(jnp.allclose(out, ref, atol=2e-2, rtol=2e-2)), f"max abs err = {max_err}"
    assert bool(jnp.allclose(jnp.sum(out, axis=1), 1.0, atol=1e-2))
    print("KERNEL_OK")
</pallas_src>

<mosaic_0001>
module attributes {stable_mosaic.version = 11 : i64} {
  func.func @frist_net_kernel(%arg0: i32, %arg1: memref<16x128xbf16, #tpu.memory_space<vmem>>, %arg2: memref<816x768xbf16, #tpu.memory_space<vmem>>, %arg3: memref<8x128xf32, #tpu.memory_space<vmem>>, %arg4: memref<16x128xf32, #tpu.memory_space<vmem>>) attributes {dimension_semantics = [#tpu.dimension_semantics<parallel>], iteration_bounds = array<i64: 1>, scalar_prefetch = 0 : i64, scratch_operands = 0 : i64, tpu.core_type = #tpu.core_type<tc>, window_params = [{transform_indices = @transform_0, window_bounds = array<i64: 16, 128>}, {pipeline_mode = #tpu.pipeline_mode<synchronous>, transform_indices = @transform_1, window_bounds = array<i64: 816, 768>}, {pipeline_mode = #tpu.pipeline_mode<synchronous>, transform_indices = @transform_2, window_bounds = array<i64: 8, 128>}, {transform_indices = @transform_3, window_bounds = array<i64: 16, 128>}]} {
    %c0 = arith.constant 0 : index
    %c0_0 = arith.constant 0 : index
    %0 = vector.load %arg1[%c0, %c0_0] : memref<16x128xbf16, #tpu.memory_space<vmem>>, vector<16x128xbf16>
    %c0_1 = arith.constant 0 : index
    %c0_2 = arith.constant 0 : index
    %1 = vector.load %arg2[%c0_1, %c0_2] : memref<816x768xbf16, #tpu.memory_space<vmem>>, vector<128x768xbf16>
    %cst = arith.constant dense<0.000000e+00> : vector<16x768xf32>
    %2 = tpu.matmul %0, %1, %cst {dimension_numbers = #tpu.dot_dimension_numbers<[1], [0], [0], [1], [0, 0, 1, 1], [], []>} : vector<16x128xbf16>, vector<128x768xbf16>, vector<16x768xf32> -> vector<16x768xf32>
    %cst_3 = arith.constant 0.000000e+00 : f32
    %3 = vector.broadcast %cst_3 : f32 to vector<16x768xf32>
    %4 = arith.maximumf %2, %3 : vector<16x768xf32>
    %5 = vector.extract_strided_slice %4 {offsets = [0, 0], sizes = [16, 260], strides = [1, 1]} : vector<16x768xf32> to vector<16x260xf32>
    %6 = arith.truncf %5 : vector<16x260xf32> to vector<16x260xbf16>
    %7 = vector.extract_strided_slice %4 {offsets = [0, 384], sizes = [16, 260], strides = [1, 1]} : vector<16x768xf32> to vector<16x260xf32>
    %8 = arith.truncf %7 : vector<16x260xf32> to vector<16x260xbf16>
    %c128 = arith.constant 128 : index
    %c0_4 = arith.constant 0 : index
    %9 = vector.load %arg2[%c128, %c0_4] : memref<816x768xbf16, #tpu.memory_space<vmem>>, vector<260x110xbf16>
    %cst_5 = arith.constant dense<0.000000e+00> : vector<16x110xf32>
    %10 = tpu.matmul %6, %9, %cst_5 {dimension_numbers = #tpu.dot_dimension_numbers<[1], [0], [0], [1], [0, 0, 1, 1], [], []>} : vector<16x260xbf16>, vector<260x110xbf16>, vector<16x110xf32> -> vector<16x110xf32>
    %c0_6 = arith.constant 0 : index
    %c0_7 = arith.constant 0 : index
    %11 = vector.load %arg3[%c0_6, %c0_7] : memref<8x128xf32, #tpu.memory_space<vmem>>, vector<1x110xf32>
    %12 = vector.broadcast %11 : vector<1x110xf32> to vector<16x110xf32>
    %13 = arith.addf %10, %12 : vector<16x110xf32>
    %cst_8 = arith.constant 0.000000e+00 : f32
    %14 = vector.broadcast %cst_8 : f32 to vector<16x110xf32>
    %15 = arith.maximumf %13, %14 : vector<16x110xf32>
    %16 = arith.truncf %15 : vector<16x110xf32> to vector<16x110xbf16>
    %c400 = arith.constant 400 : index
    %c0_9 = arith.constant 0 : index
    %17 = vector.load %arg2[%c400, %c0_9] : memref<816x768xbf16, #tpu.memory_space<vmem>>, vector<110x20xbf16>
    %cst_10 = arith.constant dense<0.000000e+00> : vector<16x20xf32>
    %18 = tpu.matmul %16, %17, %cst_10 {dimension_numbers = #tpu.dot_dimension_numbers<[1], [0], [0], [1], [0, 0, 1, 1], [], []>} : vector<16x110xbf16>, vector<110x20xbf16>, vector<16x20xf32> -> vector<16x20xf32>
    %c512 = arith.constant 512 : index
    %c0_11 = arith.constant 0 : index
    %19 = vector.load %arg2[%c512, %c0_11] : memref<816x768xbf16, #tpu.memory_space<vmem>>, vector<260x20xbf16>
    %cst_12 = arith.constant dense<0.000000e+00> : vector<16x20xf32>
    %20 = tpu.matmul %8, %19, %cst_12 {dimension_numbers = #tpu.dot_dimension_numbers<[1], [0], [0], [1], [0, 0, 1, 1], [], []>} : vector<16x260xbf16>, vector<260x20xbf16>, vector<16x20xf32> -> vector<16x20xf32>
    %21 = arith.addf %18, %20 : vector<16x20xf32>
    %c1 = arith.constant 1 : index
    %c0_13 = arith.constant 0 : index
    %22 = vector.load %arg3[%c1, %c0_13] : memref<8x128xf32, #tpu.memory_space<vmem>>, vector<1x20xf32>
    %23 = vector.broadcast %22 : vector<1x20xf32> to vector<16x20xf32>
    %24 = arith.addf %21, %23 : vector<16x20xf32>
    %cst_14 = arith.constant 0.000000e+00 : f32
    %25 = vector.broadcast %cst_14 : f32 to vector<16x20xf32>
    %26 = arith.maximumf %24, %25 : vector<16x20xf32>
    %27 = arith.truncf %26 : vector<16x20xf32> to vector<16x20xbf16>
    %c784 = arith.constant 784 : index
    %c0_15 = arith.constant 0 : index
    %28 = vector.load %arg2[%c784, %c0_15] : memref<816x768xbf16, #tpu.memory_space<vmem>>, vector<20x128xbf16>
    %cst_16 = arith.constant dense<0.000000e+00> : vector<16x128xf32>
    %29 = tpu.matmul %27, %28, %cst_16 {dimension_numbers = #tpu.dot_dimension_numbers<[1], [0], [0], [1], [0, 0, 1, 1], [], []>} : vector<16x20xbf16>, vector<20x128xbf16>, vector<16x128xf32> -> vector<16x128xf32>
    %c2 = arith.constant 2 : index
    %c0_17 = arith.constant 0 : index
    %30 = vector.load %arg3[%c2, %c0_17] : memref<8x128xf32, #tpu.memory_space<vmem>>, vector<1x128xf32>
    %31 = vector.broadcast %30 : vector<1x128xf32> to vector<16x128xf32>
    %32 = arith.addf %29, %31 : vector<16x128xf32>
    %cst_18 = arith.constant dense<0xFF800000> : vector<16xf32>
    %33 = vector.multi_reduction <maximumf>, %32, %cst_18 [1] : vector<16x128xf32> to vector<16xf32>
    %34 = vector.shape_cast %33 : vector<16xf32> to vector<16x1xf32>
    %35 = vector.broadcast %34 : vector<16x1xf32> to vector<16x128xf32>
    %36 = arith.subf %32, %35 : vector<16x128xf32>
    %37 = math.exp %36 : vector<16x128xf32>
    %cst_19 = arith.constant dense<0.000000e+00> : vector<16xf32>
    %38 = vector.multi_reduction <add>, %37, %cst_19 [1] : vector<16x128xf32> to vector<16xf32>
    %39 = vector.shape_cast %38 : vector<16xf32> to vector<16x1xf32>
    %40 = tpu.reciprocal %39 {approx = true} : vector<16x1xf32> -> vector<16x1xf32>
    %41 = vector.broadcast %40 : vector<16x1xf32> to vector<16x128xf32>
    %42 = arith.mulf %37, %41 : vector<16x128xf32>
    %c0_20 = arith.constant 0 : index
    %c0_21 = arith.constant 0 : index
    %43 = vector.load %arg4[%c0_20, %c0_21] : memref<16x128xf32, #tpu.memory_space<vmem>>, vector<16x128xf32>
    tpu.vector_store %arg4[%c0_20, %c0_21], %42 {strides = array<i32>} : memref<16x128xf32, #tpu.memory_space<vmem>>, vector<16x128xf32>,
    return
  }
  func.func @transform_0(%arg0: i32) -> (i32, i32) {
    %c0_i32 = arith.constant 0 : i32
    %c0_i32_0 = arith.constant 0 : i32
    return %arg0, %c0_i32 : i32, i32
  }
  func.func @transform_1(%arg0: i32) -> (i32, i32) {
    %c0_i32 = arith.constant 0 : i32
    %c0_i32_0 = arith.constant 0 : i32
    %c0_i32_1 = arith.constant 0 : i32
    return %c0_i32, %c0_i32_0 : i32, i32
  }
  func.func @transform_2(%arg0: i32) -> (i32, i32) {
    %c0_i32 = arith.constant 0 : i32
    %c0_i32_0 = arith.constant 0 : i32
    %c0_i32_1 = arith.constant 0 : i32
    return %c0_i32, %c0_i32_0 : i32, i32
  }
  func.func @transform_3(%arg0: i32) -> (i32, i32) {
    %c0_i32 = arith.constant 0 : i32
    %c0_i32_0 = arith.constant 0 : i32
    return %arg0, %c0_i32 : i32, i32
  }
}

</mosaic_0001>

<llo_original>
// kernel: tpu_custom_call.1
$region0: #{tpu_custom_call.1}
  #allocation0 [shape = 'u32[]', space=smem, size = 0x4, offset = 0x4, fixed_abs, tag = 'smem constant byte address 0x4 - core index']
  #allocation1 [shape = 'u32[144,128]{1,0:T(1,128)}', space=vmem, size = 0x12000, scoped, tag = 'internal scratch']
  %s0 = inlined_call_operand.hbm [shape: bf16[16,128], index: 0, kind: input, shape index: {}]
  %s1 = inlined_call_operand.hbm [shape: bf16[816,768], index: 1, kind: input, shape index: {}]
  %s2 = inlined_call_operand.hbm [shape: f32[8,128], index: 2, kind: input, shape index: {}]
  %s3 = inlined_call_operand.hbm [shape: f32[16,128], index: 3, kind: output, shape index: {}]
  %s4 = sld [smem:[#allocation0]]
  $region34: #{tpu_custom_call.1} parent=0
    _
  %s6 = ssub.s32 1, %s4
  %s7 = scalar_select 0, %s6, %s4
  $region1: #{tpu_custom_call.1} parent=0
    #allocation2 [shape = 'u8[4096]{0}', space=vmem, size = 0x1000, scoped, tag = 'input window, operand 0, single buffered']
    #allocation3 [shape = 's32[1]{0}', space=sflag, size = 0x4, scoped, tag = 'scoped memory for tpu_custom_call.1']
    #allocation4 [shape = 's32[1]{0}', space=sflag, size = 0x4, scoped, tag = 'scoped memory for tpu_custom_call.1']
    #allocation5 [shape = 'u8[1253376]{0}', space=vmem, size = 0x132000, scoped, tag = 'input window, operand 1, single buffered']
    #allocation6 [shape = 's32[1]{0}', space=sflag, size = 0x4, scoped, tag = 'scoped memory for tpu_custom_call.1']
    #allocation7 [shape = 'u8[4096]{0}', space=vmem, size = 0x1000, scoped, tag = 'input window, operand 2, single buffered']
    #allocation8 [shape = 'u8[8192]{0}', space=vmem, size = 0x2000, scoped, tag = 'output window, operand 0, single buffered']
    %8 = vsyncpa [#allocation3], 0
    %9 = vsyncpa [#allocation6], 0
    %10 = vsyncpa [#allocation4], 0
    // Predicated region
    $region2: #{tpu_custom_call.1} parent=1 // pred_check
      _
    $region3: #{tpu_custom_call.1} parent=1 // pred_check_branch
      %12 = sbr.rel (0) target = $region5
    $region4: #{tpu_custom_call.1} parent=1 // pred_region
      %s14 = ssub.s32 128, 128
      %15 = vsyncadd [#allocation3], %s14
      %s16 = sshll.u32 [#allocation2], 4
      %s17 = int_to_ptr.vmem [resolvable:$true] %s16
      %22 = dma.hbm_to_vmem [thread:$0]  %s0, 128, %s17, [#allocation3], 64, 64, 4
    $region5: #{tpu_custom_call.1} parent=1 // pred_fallthru
      _
    // Predicated region
    $region6: #{tpu_custom_call.1} parent=1 // pred_check
      _
    $region7: #{tpu_custom_call.1} parent=1 // pred_check_branch
      %24 = sbr.rel (0) target = $region9
    $region8: #{tpu_custom_call.1} parent=1 // pred_region
      %s26 = ssub.s32 39168, 39168
      %27 = vsyncadd [#allocation6], %s26
      %s28 = sshll.u32 [#allocation5], 4
      %s29 = int_to_ptr.vmem [resolvable:$true] %s28
      %34 = dma.hbm_to_vmem [thread:$0]  %s1, 39168, %s29, [#allocation6], 384, 384, 24
    $region9: #{tpu_custom_call.1} parent=1 // pred_fallthru
      _
    // Predicated region
    $region10: #{tpu_custom_call.1} parent=1 // pred_check
      _
    $region11: #{tpu_custom_call.1} parent=1 // pred_check_branch
      %36 = sbr.rel (0) target = $region13
    $region12: #{tpu_custom_call.1} parent=1 // pred_region
      %s38 = ssub.s32 128, 128
      %39 = vsyncadd [#allocation6], %s38
      %s41 = sshll.u32 [#allocation7], 4
      %s42 = int_to_ptr.vmem [resolvable:$true] %s41
      %44 = dma.hbm_to_vmem [thread:$0]  %s2, 128, %s42, [#allocation6]
    $region13: #{tpu_custom_call.1} parent=1 // pred_fallthru
      _
    // Predicated region
    $region14: #{tpu_custom_call.1} parent=1 // pred_check
      _
    $region15: #{tpu_custom_call.1} parent=1 // pred_check_branch
      %46 = sbr.rel (0) target = $region17
    $region16: #{tpu_custom_call.1} parent=1 // pred_region
      %47 = dma.done [#allocation3], 128
    $region17: #{tpu_custom_call.1} parent=1 // pred_fallthru
      _
    // Predicated region
    $region18: #{tpu_custom_call.1} parent=1 // pred_check
      _
    $region19: #{tpu_custom_call.1} parent=1 // pred_check_branch
      %49 = sbr.rel (0) target = $region21
    $region20: #{tpu_custom_call.1} parent=1 // pred_region
      %50 = dma.done [#allocation6], 39168
    $region21: #{tpu_custom_call.1} parent=1 // pred_fallthru
      _
    // Predicated region
    $region22: #{tpu_custom_call.1} parent=1 // pred_check
      _
    $region23: #{tpu_custom_call.1} parent=1 // pred_check_branch
      %52 = sbr.rel (0) target = $region25
    $region24: #{tpu_custom_call.1} parent=1 // pred_region
      %53 = dma.done [#allocation6], 128
    $region25: #{tpu_custom_call.1} parent=1 // pred_fallthru
      _
    %v55 = vld [vmem:[#allocation2] sm:$0xf]
    %v56 = vld [vmem:[#allocation2 + $0x4] sm:$0xf]
    %v57 = vld [vmem:[#allocation5] sm:$0xff]
    %v58 = vld [vmem:[#allocation5 + $0x8] sm:$0xff]
    %v59 = vld [vmem:[#allocation5 + $0x10] sm:$0xff]
    %v60 = vld [vmem:[#allocation5 + $0x18] sm:$0xff]
    %v61 = vld [vmem:[#allocation5 + $0x20] sm:$0xff]
    %v62 = vld [vmem:[#allocation5 + $0x28] sm:$0xff]
    %v63 = vld [vmem:[#allocation5 + $0x30] sm:$0xff]
    %v64 = vld [vmem:[#allocation5 + $0x38] sm:$0xff]
    %v65 = vld [vmem:[#allocation5 + $0x40] sm:$0xff]
    %v66 = vld [vmem:[#allocation5 + $0x48] sm:$0xff]
    %v67 = vld [vmem:[#allocation5 + $0x50] sm:$0xff]
    %v68 = vld [vmem:[#allocation5 + $0x58] sm:$0xff]
    %v69 = vld [vmem:[#allocation5 + $0x60] sm:$0xff]
    %v70 = vld [vmem:[#allocation5 + $0x68] sm:$0xff]
    %v71 = vld [vmem:[#allocation5 + $0x70] sm:$0xff]
    %v72 = vld [vmem:[#allocation5 + $0x78] sm:$0xff]
    %v73 = vld [vmem:[#allocation5 + $0x80] sm:$0xff]
    %v74 = vld [vmem:[#allocation5 + $0x88] sm:$0xff]
    %v75 = vld [vmem:[#allocation5 + $0x90] sm:$0xff]
    %v76 = vld [vmem:[#allocation5 + $0x98] sm:$0xff]
    %v77 = vld [vmem:[#allocation5 + $0xa0] sm:$0xff]
    %v78 = vld [vmem:[#allocation5 + $0xa8] sm:$0xff]
    %v79 = vld [vmem:[#allocation5 + $0xb0] sm:$0xff]
    %v80 = vld [vmem:[#allocation5 + $0xb8] sm:$0xff]
    %v81 = vld [vmem:[#allocation5 + $0xc0] sm:$0xff]
    %v82 = vld [vmem:[#allocation5 + $0xc8] sm:$0xff]
    %v83 = vld [vmem:[#allocation5 + $0xd0] sm:$0xff]
    %v84 = vld [vmem:[#allocation5 + $0xd8] sm:$0xff]
    %v85 = vld [vmem:[#allocation5 + $0xe0] sm:$0xff]
    %v86 = vld [vmem:[#allocation5 + $0xe8] sm:$0xff]
    %v87 = vld [vmem:[#allocation5 + $0xf0] sm:$0xff]
    %v88 = vld [vmem:[#allocation5 + $0xf8] sm:$0xff]
    %v89 = vld [vmem:[#allocation5 + $0x100] sm:$0xff]
    %v90 = vld [vmem:[#allocation5 + $0x108] sm:$0xff]
    %v91 = vld [vmem:[#allocation5 + $0x110] sm:$0xff]
    %v92 = vld [vmem:[#allocation5 + $0x118] sm:$0xff]
    %v93 = vld [vmem:[#allocation5 + $0x120] sm:$0xff]
    %v94 = vld [vmem:[#allocation5 + $0x128] sm:$0xff]
    %v95 = vld [vmem:[#allocation5 + $0x130] sm:$0xff]
    %v96 = vld [vmem:[#allocation5 + $0x138] sm:$0xff]
    %v97 = vld [vmem:[#allocation5 + $0x140] sm:$0xff]
    %v98 = vld [vmem:[#allocation5 + $0x148] sm:$0xff]
    %v99 = vld [vmem:[#allocation5 + $0x150] sm:$0xff]
    %v100 = vld [vmem:[#allocation5 + $0x158] sm:$0xff]
    %v101 = vld [vmem:[#allocation5 + $0x160] sm:$0xff]
    %v102 = vld [vmem:[#allocation5 + $0x168] sm:$0xff]
    %v103 = vld [vmem:[#allocation5 + $0x170] sm:$0xff]
    %v104 = vld [vmem:[#allocation5 + $0x178] sm:$0xff]
    %v107 = vunpack.c.l.b16 %v55
    %v108 = vunpack.c.l.b16 %v56
    %v109 = vpack.c.b16 %v108, %v107
    %v159 = vunpack.c.l.b16 %v57
    %v160 = vunpack.c.h.b16 %v57
    %v161 = vunpack.c.l.b16 %v58
    %v162 = vunpack.c.h.b16 %v58
    %v163 = vunpack.c.l.b16 %v59
    %v164 = vunpack.c.h.b16 %v59
    %v165 = vunpack.c.l.b16 %v60
    %v166 = vunpack.c.h.b16 %v60
    %v167 = vunpack.c.l.b16 %v61
    %v168 = vunpack.c.h.b16 %v61
    %v169 = vunpack.c.l.b16 %v62
    %v170 = vunpack.c.h.b16 %v62
    %v171 = vunpack.c.l.b16 %v63
    %v172 = vunpack.c.h.b16 %v63
    %v173 = vunpack.c.l.b16 %v64
    %v174 = vunpack.c.h.b16 %v64
    %v175 = vunpack.c.l.b16 %v65
    %v176 = vunpack.c.h.b16 %v65
    %v177 = vunpack.c.l.b16 %v66
    %v178 = vunpack.c.h.b16 %v66
    %v179 = vunpack.c.l.b16 %v67
    %v180 = vunpack.c.h.b16 %v67
    %v181 = vunpack.c.l.b16 %v68
    %v182 = vunpack.c.h.b16 %v68
    %v183 = vunpack.c.l.b16 %v69
    %v184 = vunpack.c.h.b16 %v69
    %v185 = vunpack.c.l.b16 %v70
    %v186 = vunpack.c.h.b16 %v70
    %v187 = vunpack.c.l.b16 %v71
    %v188 = vunpack.c.h.b16 %v71
    %v189 = vunpack.c.l.b16 %v72
    %v190 = vunpack.c.h.b16 %v72
    %v191 = vunpack.c.l.b16 %v73
    %v192 = vunpack.c.h.b16 %v73
    %v193 = vunpack.c.l.b16 %v74
    %v194 = vunpack.c.h.b16 %v74
    %v195 = vunpack.c.l.b16 %v75
    %v196 = vunpack.c.h.b16 %v75
    %v197 = vunpack.c.l.b16 %v76
    %v198 = vunpack.c.h.b16 %v76
    %v199 = vunpack.c.l.b16 %v77
    %v200 = vunpack.c.h.b16 %v77
    %v201 = vunpack.c.l.b16 %v78
    %v202 = vunpack.c.h.b16 %v78
    %v203 = vunpack.c.l.b16 %v79
    %v204 = vunpack.c.h.b16 %v79
    %v205 = vunpack.c.l.b16 %v80
    %v206 = vunpack.c.h.b16 %v80
    %v207 = vunpack.c.l.b16 %v81
    %v208 = vunpack.c.h.b16 %v81
    %v209 = vunpack.c.l.b16 %v82
    %v210 = vunpack.c.h.b16 %v82
    %v211 = vunpack.c.l.b16 %v83
    %v212 = vunpack.c.h.b16 %v83
    %v213 = vunpack.c.l.b16 %v84
    %v214 = vunpack.c.h.b16 %v84
    %v215 = vunpack.c.l.b16 %v85
    %v216 = vunpack.c.h.b16 %v85
    %v217 = vunpack.c.l.b16 %v86
    %v218 = vunpack.c.h.b16 %v86
    %v219 = vunpack.c.l.b16 %v87
    %v220 = vunpack.c.h.b16 %v87
    %v221 = vunpack.c.l.b16 %v88
    %v222 = vunpack.c.h.b16 %v88
    %v223 = vunpack.c.l.b16 %v89
    %v224 = vunpack.c.h.b16 %v89
    %v225 = vunpack.c.l.b16 %v90
    %v226 = vunpack.c.h.b16 %v90
    %v227 = vunpack.c.l.b16 %v91
    %v228 = vunpack.c.h.b16 %v91
    %v229 = vunpack.c.l.b16 %v92
    %v230 = vunpack.c.h.b16 %v92
    %v231 = vunpack.c.l.b16 %v93
    %v232 = vunpack.c.h.b16 %v93
    %v233 = vunpack.c.l.b16 %v94
    %v234 = vunpack.c.h.b16 %v94
    %v235 = vunpack.c.l.b16 %v95
    %v236 = vunpack.c.h.b16 %v95
    %v237 = vunpack.c.l.b16 %v96
    %v238 = vunpack.c.h.b16 %v96
    %v239 = vunpack.c.l.b16 %v97
    %v240 = vunpack.c.h.b16 %v97
    %v241 = vunpack.c.l.b16 %v98
    %v242 = vunpack.c.h.b16 %v98
    %v243 = vunpack.c.l.b16 %v99
    %v244 = vunpack.c.h.b16 %v99
    %v245 = vunpack.c.l.b16 %v100
    %v246 = vunpack.c.h.b16 %v100
    %v247 = vunpack.c.l.b16 %v101
    %v248 = vunpack.c.h.b16 %v101
    %v249 = vunpack.c.l.b16 %v102
    %v250 = vunpack.c.h.b16 %v102
    %v251 = vunpack.c.l.b16 %v103
    %v252 = vunpack.c.h.b16 %v103
    %v253 = vunpack.c.l.b16 %v104
    %v254 = vunpack.c.h.b16 %v104
    %v255 = vpack.c.b16 %v165, %v159
    %v256 = vpack.c.b16 %v166, %v160
    %v257 = vpack.c.b16 %v167, %v161
    %v258 = vpack.c.b16 %v168, %v162
    %v259 = vpack.c.b16 %v169, %v163
    %v260 = vpack.c.b16 %v170, %v164
    %v261 = vpack.c.b16 %v177, %v171
    %v262 = vpack.c.b16 %v178, %v172
    %v263 = vpack.c.b16 %v179, %v173
    %v264 = vpack.c.b16 %v180, %v174
    %v265 = vpack.c.b16 %v181, %v175
    %v266 = vpack.c.b16 %v182, %v176
    %v267 = vpack.c.b16 %v189, %v183
    %v268 = vpack.c.b16 %v190, %v184
    %v269 = vpack.c.b16 %v191, %v185
    %v270 = vpack.c.b16 %v192, %v186
    %v271 = vpack.c.b16 %v193, %v187
    %v272 = vpack.c.b16 %v194, %v188
    %v273 = vpack.c.b16 %v201, %v195
    %v274 = vpack.c.b16 %v202, %v196
    %v275 = vpack.c.b16 %v203, %v197
    %v276 = vpack.c.b16 %v204, %v198
    %v277 = vpack.c.b16 %v205, %v199
    %v278 = vpack.c.b16 %v206, %v200
    %v279 = vpack.c.b16 %v213, %v207
    %v280 = vpack.c.b16 %v214, %v208
    %v281 = vpack.c.b16 %v215, %v209
    %v282 = vpack.c.b16 %v216, %v210
    %v283 = vpack.c.b16 %v217, %v211
    %v284 = vpack.c.b16 %v218, %v212
    %v285 = vpack.c.b16 %v225, %v219
    %v286 = vpack.c.b16 %v226, %v220
    %v287 = vpack.c.b16 %v227, %v221
    %v288 = vpack.c.b16 %v228, %v222
    %v289 = vpack.c.b16 %v229, %v223
    %v290 = vpack.c.b16 %v230, %v224
    %v291 = vpack.c.b16 %v237, %v231
    %v292 = vpack.c.b16 %v238, %v232
    %v293 = vpack.c.b16 %v239, %v233
    %v294 = vpack.c.b16 %v240, %v234
    %v295 = vpack.c.b16 %v241, %v235
    %v296 = vpack.c.b16 %v242, %v236
    %v297 = vpack.c.b16 %v249, %v243
    %v298 = vpack.c.b16 %v250, %v244
    %v299 = vpack.c.b16 %v251, %v245
    %v300 = vpack.c.b16 %v252, %v246
    %v301 = vpack.c.b16 %v253, %v247
    %v302 = vpack.c.b16 %v254, %v248
    %351 = vmatprep.subr.bf16.mxu0 %v256
    %352 = vmatpush1.bf16.msra.mxu0 %v255
    %353 = vmatprep.subr.bf16.mxu0 %v262
    %354 = vmatpush1.bf16.msra.mxu0 %v261
    %355 = vmatprep.subr.bf16.mxu0 %v268
    %356 = vmatpush1.bf16.msra.mxu0 %v267
    %357 = vmatprep.subr.bf16.mxu0 %v274
    %358 = vmatpush1.bf16.msra.mxu0 %v273
    %359 = vmatprep.subr.bf16.mxu0 %v280
    %360 = vmatpush1.bf16.msra.mxu0 %v279
    %361 = vmatprep.subr.bf16.mxu0 %v286
    %362 = vmatpush1.bf16.msra.mxu0 %v285
    %363 = vmatprep.subr.bf16.mxu0 %v292
    %364 = vmatpush1.bf16.msra.mxu0 %v291
    %365 = vmatprep.subr.bf16.mxu0 %v298
    %366 = vmatpush1.bf16.msra.mxu0 %v297
    %367 = vmatprep.subr.bf16.mxu0 0
    %368 = vmatpush1.bf16.msra.mxu0 0
    %369 = vmatprep.subr.bf16.mxu0 0
    %370 = vmatpush1.bf16.msra.mxu0 0
    %371 = vmatprep.subr.bf16.mxu0 0
    %372 = vmatpush1.bf16.msra.mxu0 0
    %373 = vmatprep.subr.bf16.mxu0 0
    %374 = vmatpush1.bf16.msra.mxu0 0
    %375 = vmatprep.subr.bf16.mxu0 0
    %376 = vmatpush1.bf16.msra.mxu0 0
    %377 = vmatprep.subr.bf16.mxu0 0
    %378 = vmatpush1.bf16.msra.mxu0 0
    %379 = vmatprep.subr.bf16.mxu0 0
    %380 = vmatpush1.bf16.msra.mxu0 0
    %381 = vmatprep.subr.bf16.mxu0 0
    %382 = vmatpush1.bf16.msra.mxu0 0
    %383 = vmatprep.mubr.bf16.mxu0 0
    %384 = vmatmul.mubr.bf16.gmra.mrb[0].mxu0 %v109
    %v385 = vpop.f32.mrb[0].mxu0
    %v386 = vadd.f32 0.0, %v385
    %v387 = vpop.f32.mrb[0].mxu0
    %v388 = vadd.f32 0.0, %v387
    %v389 = vpop.f32.mrb[0].mxu0
    %v390 = vadd.f32 0.0, %v389
    %v391 = vpop.f32.mrb[0].mxu0
    %v392 = vadd.f32 0.0, %v391
    %393 = vdwg.mxu0
    %394 = vmatprep.subr.bf16.mxu0 %v258
    %395 = vmatpush1.bf16.msra.mxu0 %v257
    %396 = vmatprep.subr.bf16.mxu0 %v264
    %397 = vmatpush1.bf16.msra.mxu0 %v263
    %398 = vmatprep.subr.bf16.mxu0 %v270
    %399 = vmatpush1.bf16.msra.mxu0 %v269
    %400 = vmatprep.subr.bf16.mxu0 %v276
    %401 = vmatpush1.bf16.msra.mxu0 %v275
    %402 = vmatprep.subr.bf16.mxu0 %v282
    %403 = vmatpush1.bf16.msra.mxu0 %v281
    %404 = vmatprep.subr.bf16.mxu0 %v288
    %405 = vmatpush1.bf16.msra.mxu0 %v287
    %406 = vmatprep.subr.bf16.mxu0 %v294
    %407 = vmatpush1.bf16.msra.mxu0 %v293
    %408 = vmatprep.subr.bf16.mxu0 %v300
    %409 = vmatpush1.bf16.msra.mxu0 %v299
    %410 = vmatprep.subr.bf16.mxu0 0
    %411 = vmatpush1.bf16.msra.mxu0 0
    %412 = vmatprep.subr.bf16.mxu0 0
    %413 = vmatpush1.bf16.msra.mxu0 0
    %414 = vmatprep.subr.bf16.mxu0 0
    %415 = vmatpush1.bf16.msra.mxu0 0
    %416 = vmatprep.subr.bf16.mxu0 0
    %417 = vmatpush1.bf16.msra.mxu0 0
    %418 = vmatprep.subr.bf16.mxu0 0
    %419 = vmatpush1.bf16.msra.mxu0 0
    %420 = vmatprep.subr.bf16.mxu0 0
    %421 = vmatpush1.bf16.msra.mxu0 0
    %422 = vmatprep.subr.bf16.mxu0 0
    %423 = vmatpush1.bf16.msra.mxu0 0
    %424 = vmatprep.subr.bf16.mxu0 0
    %425 = vmatpush1.bf16.msra.mxu0 0
    %426 = vmatprep.mubr.bf16.mxu0 0
    %427 = vmatmul.mubr.bf16.gmra.mrb[0].mxu0 %v109
    %v428 = vpop.f32.mrb[0].mxu0
    %v429 = vadd.f32 0.0, %v428
    %v430 = vpop.f32.mrb[0].mxu0
    %v431 = vadd.f32 0.0, %v430
    %v432 = vpop.f32.mrb[0].mxu0
    %v433 = vadd.f32 0.0, %v432
    %v434 = vpop.f32.mrb[0].mxu0
    %v435 = vadd.f32 0.0, %v434
    %436 = vdwg.mxu0
    %437 = vmatprep.subr.bf16.mxu0 %v260
    %438 = vmatpush1.bf16.msra.mxu0 %v259
    %439 = vmatprep.subr.bf16.mxu0 %v266
    %440 = vmatpush1.bf16.msra.mxu0 %v265
    %441 = vmatprep.subr.bf16.mxu0 %v272
    %442 = vmatpush1.bf16.msra.mxu0 %v271
    %443 = vmatprep.subr.bf16.mxu0 %v278
    %444 = vmatpush1.bf16.msra.mxu0 %v277
    %445 = vmatprep.subr.bf16.mxu0 %v284
    %446 = vmatpush1.bf16.msra.mxu0 %v283
    %447 = vmatprep.subr.bf16.mxu0 %v290
    %448 = vmatpush1.bf16.msra.mxu0 %v289
    %449 = vmatprep.subr.bf16.mxu0 %v296
    %450 = vmatpush1.bf16.msra.mxu0 %v295
    %451 = vmatprep.subr.bf16.mxu0 %v302
    %452 = vmatpush1.bf16.msra.mxu0 %v301
    %453 = vmatprep.subr.bf16.mxu0 0
    %454 = vmatpush1.bf16.msra.mxu0 0
    %455 = vmatprep.subr.bf16.mxu0 0
    %456 = vmatpush1.bf16.msra.mxu0 0
    %457 = vmatprep.subr.bf16.mxu0 0
    %458 = vmatpush1.bf16.msra.mxu0 0
    %459 = vmatprep.subr.bf16.mxu0 0
    %460 = vmatpush1.bf16.msra.mxu0 0
    %461 = vmatprep.subr.bf16.mxu0 0
    %462 = vmatpush1.bf16.msra.mxu0 0
    %463 = vmatprep.subr.bf16.mxu0 0
    %464 = vmatpush1.bf16.msra.mxu0 0
    %465 = vmatprep.subr.bf16.mxu0 0
    %466 = vmatpush1.bf16.msra.mxu0 0
    %467 = vmatprep.subr.bf16.mxu0 0
    %468 = vmatpush1.bf16.msra.mxu0 0
    %469 = vmatprep.mubr.bf16.mxu0 0
    %470 = vmatmul.mubr.bf16.gmra.mrb[0].mxu0 %v109
    %v471 = vpop.f32.mrb[0].mxu0
    %v472 = vadd.f32 0.0, %v471
    %v473 = vpop.f32.mrb[0].mxu0
    %v474 = vadd.f32 0.0, %v473
    %v475 = vpop.f32.mrb[0].mxu0
    %v476 = vadd.f32 0.0, %v475
    %v477 = vpop.f32.mrb[0].mxu0
    %v478 = vadd.f32 0.0, %v477
    %479 = vdwg.mxu0
    %v480 = vmax.f32 %v386, 0.0
    %v481 = vmax.f32 %v388, 0.0
    %v482 = vmax.f32 %v429, 0.0
    %v483 = vmax.f32 %v431, 0.0
    %v484 = vmax.f32 %v472, 0.0
    %v485 = vmax.f32 %v474, 0.0
    %v486 = vmax.f32 %v390, 0.0
    %v487 = vmax.f32 %v392, 0.0
    %v488 = vmax.f32 %v433, 0.0
    %v489 = vmax.f32 %v435, 0.0
    %v490 = vmax.f32 %v476, 0.0
    %v491 = vmax.f32 %v478, 0.0
    %v492 = vpack.c.bf16 %v486, %v480
    %v493 = vpack.c.bf16 %v487, %v481
    %v494 = vpack.c.bf16 %v488, %v482
    %v495 = vpack.c.bf16 %v489, %v483
    %v496 = vpack.c.bf16 %v490, %v484
    %v497 = vpack.c.bf16 %v491, %v485
    %v498 = vld [vmem:[#allocation5 + $0x180] sm:$0xf]
    %v499 = vld [vmem:[#allocation5 + $0x198] sm:$0xf]
    %v500 = vld [vmem:[#allocation5 + $0x1b0] sm:$0xf]
    %v501 = vld [vmem:[#allocation5 + $0x1c8] sm:$0xf]
    %v502 = vld [vmem:[#allocation5 + $0x1e0] sm:$0xf]
    %v503 = vld [vmem:[#allocation5 + $0x1f8] sm:$0xf]
    %v504 = vld [vmem:[#allocation5 + $0x210] sm:$0xf]
    %v505 = vld [vmem:[#allocation5 + $0x228] sm:$0xf]
    %v506 = vld [vmem:[#allocation5 + $0x240] sm:$0xf]
    %v507 = vld [vmem:[#allocation5 + $0x258] sm:$0xf]
    %v508 = vld [vmem:[#allocation5 + $0x270] sm:$0xf]
    %v509 = vld [vmem:[#allocation5 + $0x288] sm:$0xf]
    %v510 = vld [vmem:[#allocation5 + $0x2a0] sm:$0xf]
    %v511 = vld [vmem:[#allocation5 + $0x2b8] sm:$0xf]
    %v512 = vld [vmem:[#allocation5 + $0x2d0] sm:$0xf]
    %v513 = vld [vmem:[#allocation5 + $0x2e8] sm:$0xf]
    %v514 = vld [vmem:[#allocation5 + $0x300] sm:$0xf]
    %v515 = vld [vmem:[#allocation5 + $0x318] sm:$0xf]
    %v516 = vld [vmem:[#allocation5 + $0x330] sm:$0xf]
    %v517 = vld [vmem:[#allocation5 + $0x348] sm:$0xf]
    %v518 = vld [vmem:[#allocation5 + $0x360] sm:$0xf]
    %v519 = vld [vmem:[#allocation5 + $0x378] sm:$0xf]
    %v520 = vld [vmem:[#allocation5 + $0x390] sm:$0xf]
    %v521 = vld [vmem:[#allocation5 + $0x3a8] sm:$0xf]
    %v522 = vld [vmem:[#allocation5 + $0x3c0] sm:$0xf]
    %v523 = vld [vmem:[#allocation5 + $0x3d8] sm:$0xf]
    %v524 = vld [vmem:[#allocation5 + $0x3f0] sm:$0xf]
    %v525 = vld [vmem:[#allocation5 + $0x408] sm:$0xf]
    %v526 = vld [vmem:[#allocation5 + $0x420] sm:$0xf]
    %v527 = vld [vmem:[#allocation5 + $0x438] sm:$0xf]
    %v528 = vld [vmem:[#allocation5 + $0x450] sm:$0xf]
    %v529 = vld [vmem:[#allocation5 + $0x468] sm:$0xf]
    %v530 = vld [vmem:[#allocation5 + $0x480] sm:$0x3]
    %v531 = vld [vmem:[#allocation7] sm:$0x1]
    %v532 = vlaneseq
    %v533 = vshrl.u32 %v532, 7
    %v534 = vsub.s32 0, %v533
    %v535 = vrot.slane %v531, %v534
    %v569 = vunpack.c.l.b16 %v498
    %v570 = vunpack.c.l.b16 %v499
    %v571 = vunpack.c.l.b16 %v500
    %v572 = vunpack.c.l.b16 %v501
    %v573 = vunpack.c.l.b16 %v502
    %v574 = vunpack.c.l.b16 %v503
    %v575 = vunpack.c.l.b16 %v504
    %v576 = vunpack.c.l.b16 %v505
    %v577 = vunpack.c.l.b16 %v506
    %v578 = vunpack.c.l.b16 %v507
    %v579 = vunpack.c.l.b16 %v508
    %v580 = vunpack.c.l.b16 %v509
    %v581 = vunpack.c.l.b16 %v510
    %v582 = vunpack.c.l.b16 %v511
    %v583 = vunpack.c.l.b16 %v512
    %v584 = vunpack.c.l.b16 %v513
    %v585 = vunpack.c.l.b16 %v514
    %v586 = vunpack.c.l.b16 %v515
    %v587 = vunpack.c.l.b16 %v516
    %v588 = vunpack.c.l.b16 %v517
    %v589 = vunpack.c.l.b16 %v518
    %v590 = vunpack.c.l.b16 %v519
    %v591 = vunpack.c.l.b16 %v520
    %v592 = vunpack.c.l.b16 %v521
    %v593 = vunpack.c.l.b16 %v522
    %v594 = vunpack.c.l.b16 %v523
    %v595 = vunpack.c.l.b16 %v524
    %v596 = vunpack.c.l.b16 %v525
    %v597 = vunpack.c.l.b16 %v526
    %v598 = vunpack.c.l.b16 %v527
    %v599 = vunpack.c.l.b16 %v528
    %v600 = vunpack.c.l.b16 %v529
    %v601 = vunpack.c.l.b16 %v530
    %v602 = vpack.c.b16 %v570, %v569
    %v603 = vpack.c.b16 %v572, %v571
    %v604 = vpack.c.b16 %v574, %v573
    %v605 = vpack.c.b16 %v576, %v575
    %v606 = vpack.c.b16 %v578, %v577
    %v607 = vpack.c.b16 %v580, %v579
    %v608 = vpack.c.b16 %v582, %v581
    %v609 = vpack.c.b16 %v584, %v583
    %v610 = vpack.c.b16 %v586, %v585
    %v611 = vpack.c.b16 %v588, %v587
    %v612 = vpack.c.b16 %v590, %v589
    %v613 = vpack.c.b16 %v592, %v591
    %v614 = vpack.c.b16 %v594, %v593
    %v615 = vpack.c.b16 %v596, %v595
    %v616 = vpack.c.b16 %v598, %v597
    %v617 = vpack.c.b16 %v600, %v599
    %v618 = vpack.c.b16 %v601, %v601
    %vm635 = vcmask 31744
    %v637 = vsel %vm635, %v494, 0
    %vm639 = vcmask 1041408
    %v641 = vsel %vm639, %v618, 0
    %643 = vmatprep.subr.bf16.mxu0 0
    %644 = vmatpush1.bf16.msra.mxu0 %v602
    %645 = vmatprep.subr.bf16.mxu0 0
    %646 = vmatpush1.bf16.msra.mxu0 %v603
    %647 = vmatprep.subr.bf16.mxu0 0
    %648 = vmatpush1.bf16.msra.mxu0 %v604
    %649 = vmatprep.subr.bf16.mxu0 0
    %650 = vmatpush1.bf16.msra.mxu0 %v605
    %651 = vmatprep.subr.bf16.mxu0 0
    %652 = vmatpush1.bf16.msra.mxu0 %v606
    %653 = vmatprep.subr.bf16.mxu0 0
    %654 = vmatpush1.bf16.msra.mxu0 %v607
    %655 = vmatprep.subr.bf16.mxu0 0
    %656 = vmatpush1.bf16.msra.mxu0 %v608
    %657 = vmatprep.subr.bf16.mxu0 0
    %658 = vmatpush1.bf16.msra.mxu0 %v609
    %659 = vmatprep.subr.bf16.mxu0 0
    %660 = vmatpush1.bf16.msra.mxu0 %v610
    %661 = vmatprep.subr.bf16.mxu0 0
    %662 = vmatpush1.bf16.msra.mxu0 %v611
    %663 = vmatprep.subr.bf16.mxu0 0
    %664 = vmatpush1.bf16.msra.mxu0 %v612
    %665 = vmatprep.subr.bf16.mxu0 0
    %666 = vmatpush1.bf16.msra.mxu0 %v613
    %667 = vmatprep.subr.bf16.mxu0 0
    %668 = vmatpush1.bf16.msra.mxu0 %v614
    %669 = vmatprep.subr.bf16.mxu0 0
    %670 = vmatpush1.bf16.msra.mxu0 %v615
    %671 = vmatprep.subr.bf16.mxu0 0
    %672 = vmatpush1.bf16.msra.mxu0 %v616
    %673 = vmatprep.subr.bf16.mxu0 0
    %674 = vmatpush1.bf16.msra.mxu0 %v617
    %675 = vmatprep.mubr.bf16.mxu0 %v493
    %676 = vmatmul.mubr.bf16.gmra.mrb[0].mxu0 %v492
    %v677 = vpop.f32.mrb[0].mxu0
    %v678 = vadd.f32 %v535, %v677
    %v679 = vpop.f32.mrb[0].mxu0
    %v680 = vpop.f32.mrb[0].mxu0
    %v681 = vadd.f32 %v535, %v680
    %v682 = vpop.f32.mrb[0].mxu0
    %683 = vdwg.mxu0
    %684 = vmatprep.subr.bf16.mxu0 0
    %685 = vmatpush1.bf16.msra.mxu0 %v641
    %686 = vmatprep.subr.bf16.mxu0 0
    %687 = vmatpush1.bf16.msra.mxu0 0
    %688 = vmatprep.subr.bf16.mxu0 0
    %689 = vmatpush1.bf16.msra.mxu0 0
    %690 = vmatprep.subr.bf16.mxu0 0
    %691 = vmatpush1.bf16.msra.mxu0 0
    %692 = vmatprep.subr.bf16.mxu0 0
    %693 = vmatpush1.bf16.msra.mxu0 0
    %694 = vmatprep.subr.bf16.mxu0 0
    %695 = vmatpush1.bf16.msra.mxu0 0
    %696 = vmatprep.subr.bf16.mxu0 0
    %697 = vmatpush1.bf16.msra.mxu0 0
    %698 = vmatprep.subr.bf16.mxu0 0
    %699 = vmatpush1.bf16.msra.mxu0 0
    %700 = vmatprep.subr.bf16.mxu0 0
    %701 = vmatpush1.bf16.msra.mxu0 0
    %702 = vmatprep.subr.bf16.mxu0 0
    %703 = vmatpush1.bf16.msra.mxu0 0
    %704 = vmatprep.subr.bf16.mxu0 0
    %705 = vmatpush1.bf16.msra.mxu0 0
    %706 = vmatprep.subr.bf16.mxu0 0
    %707 = vmatpush1.bf16.msra.mxu0 0
    %708 = vmatprep.subr.bf16.mxu0 0
    %709 = vmatpush1.bf16.msra.mxu0 0
    %710 = vmatprep.subr.bf16.mxu0 0
    %711 = vmatpush1.bf16.msra.mxu0 0
    %712 = vmatprep.subr.bf16.mxu0 0
    %713 = vmatpush1.bf16.msra.mxu0 0
    %714 = vmatprep.subr.bf16.mxu0 0
    %715 = vmatpush1.bf16.msra.mxu0 0
    %716 = vmatprep.mubr.bf16.mxu0 0
    %717 = vmatmul.mubr.bf16.gmra.mrb[0].mxu0 %v637
    %v718 = vpop.f32.mrb[0].mxu0
    %v719 = vadd.f32 %v678, %v718
    %v720 = vpop.f32.mrb[0].mxu0
    %v721 = vpop.f32.mrb[0].mxu0
    %v722 = vadd.f32 %v681, %v721
    %v723 = vpop.f32.mrb[0].mxu0
    %724 = vdwg.mxu0
    %v725 = vmax.f32 %v719, 0.0
    %v726 = vmax.f32 %v722, 0.0
    %v727 = vpack.c.bf16 %v726, %v725
    %v728 = vld [vmem:[#allocation5 + $0x4b0] sm:$0xf]
    %v729 = vld [vmem:[#allocation5 + $0x4c8] sm:$0xf]
    %v730 = vld [vmem:[#allocation5 + $0x4e0] sm:$0xf]
    %v731 = vld [vmem:[#allocation5 + $0x4f8] sm:$0xf]
    %v732 = vld [vmem:[#allocation5 + $0x510] sm:$0xf]
    %v733 = vld [vmem:[#allocation5 + $0x528] sm:$0xf]
    %v734 = vld [vmem:[#allocation5 + $0x540] sm:$0xf]
    %v735 = vld [vmem:[#allocation5 + $0x558] sm:$0xf]
    %v736 = vld [vmem:[#allocation5 + $0x570] sm:$0xf]
    %v737 = vld [vmem:[#allocation5 + $0x588] sm:$0xf]
    %v738 = vld [vmem:[#allocation5 + $0x5a0] sm:$0xf]
    %v739 = vld [vmem:[#allocation5 + $0x5b8] sm:$0xf]
    %v740 = vld [vmem:[#allocation5 + $0x5d0] sm:$0xf]
    %v741 = vld [vmem:[#allocation5 + $0x5e8] sm:$0x7]
    %v742 = vld [vmem:[#allocation5 + $0x600] sm:$0xf]
    %v743 = vld [vmem:[#allocation5 + $0x618] sm:$0xf]
    %v744 = vld [vmem:[#allocation5 + $0x630] sm:$0xf]
    %v745 = vld [vmem:[#allocation5 + $0x648] sm:$0xf]
    %v746 = vld [vmem:[#allocation5 + $0x660] sm:$0xf]
    %v747 = vld [vmem:[#allocation5 + $0x678] sm:$0xf]
    %v748 = vld [vmem:[#allocation5 + $0x690] sm:$0xf]
    %v749 = vld [vmem:[#allocation5 + $0x6a8] sm:$0xf]
    %v750 = vld [vmem:[#allocation5 + $0x6c0] sm:$0xf]
    %v751 = vld [vmem:[#allocation5 + $0x6d8] sm:$0xf]
    %v752 = vld [vmem:[#allocation5 + $0x6f0] sm:$0xf]
    %v753 = vld [vmem:[#allocation5 + $0x708] sm:$0xf]
    %v754 = vld [vmem:[#allocation5 + $0x720] sm:$0xf]
    %v755 = vld [vmem:[#allocation5 + $0x738] sm:$0xf]
    %v756 = vld [vmem:[#allocation5 + $0x750] sm:$0xf]
    %v757 = vld [vmem:[#allocation5 + $0x768] sm:$0xf]
    %v758 = vld [vmem:[#allocation5 + $0x780] sm:$0xf]
    %v759 = vld [vmem:[#allocation5 + $0x798] sm:$0xf]
    %v760 = vld [vmem:[#allocation5 + $0x7b0] sm:$0xf]
    %v761 = vld [vmem:[#allocation5 + $0x7c8] sm:$0xf]
    %v762 = vld [vmem:[#allocation5 + $0x7e0] sm:$0xf]
    %v763 = vld [vmem:[#allocation5 + $0x7f8] sm:$0xf]
    %v764 = vld [vmem:[#allocation5 + $0x810] sm:$0xf]
    %v765 = vld [vmem:[#allocation5 + $0x828] sm:$0xf]
    %v766 = vld [vmem:[#allocation5 + $0x840] sm:$0xf]
    %v767 = vld [vmem:[#allocation5 + $0x858] sm:$0xf]
    %v768 = vld [vmem:[#allocation5 + $0x870] sm:$0xf]
    %v769 = vld [vmem:[#allocation5 + $0x888] sm:$0xf]
    %v770 = vld [vmem:[#allocation5 + $0x8a0] sm:$0xf]
    %v771 = vld [vmem:[#allocation5 + $0x8b8] sm:$0xf]
    %v772 = vld [vmem:[#allocation5 + $0x8d0] sm:$0xf]
    %v773 = vld [vmem:[#allocation5 + $0x8e8] sm:$0xf]
    %v774 = vld [vmem:[#allocation5 + $0x900] sm:$0x3]
    %v808 = vunpack.c.l.b16 %v742
    %v809 = vunpack.c.l.b16 %v743
    %v810 = vunpack.c.l.b16 %v744
    %v811 = vunpack.c.l.b16 %v745
    %v812 = vunpack.c.l.b16 %v746
    %v813 = vunpack.c.l.b16 %v747
    %v814 = vunpack.c.l.b16 %v748
    %v815 = vunpack.c.l.b16 %v749
    %v816 = vunpack.c.l.b16 %v750
    %v817 = vunpack.c.l.b16 %v751
    %v818 = vunpack.c.l.b16 %v752
    %v819 = vunpack.c.l.b16 %v753
    %v820 = vunpack.c.l.b16 %v754
    %v821 = vunpack.c.l.b16 %v755
    %v822 = vunpack.c.l.b16 %v756
    %v823 = vunpack.c.l.b16 %v757
    %v824 = vunpack.c.l.b16 %v758
    %v825 = vunpack.c.l.b16 %v759
    %v826 = vunpack.c.l.b16 %v760
    %v827 = vunpack.c.l.b16 %v761
    %v828 = vunpack.c.l.b16 %v762
    %v829 = vunpack.c.l.b16 %v763
    %v830 = vunpack.c.l.b16 %v764
    %v831 = vunpack.c.l.b16 %v765
    %v832 = vunpack.c.l.b16 %v766
    %v833 = vunpack.c.l.b16 %v767
    %v834 = vunpack.c.l.b16 %v768
    %v835 = vunpack.c.l.b16 %v769
    %v836 = vunpack.c.l.b16 %v770
    %v837 = vunpack.c.l.b16 %v771
    %v838 = vunpack.c.l.b16 %v772
    %v839 = vunpack.c.l.b16 %v773
    %v840 = vunpack.c.l.b16 %v774
    %v841 = vpack.c.b16 %v809, %v808
    %v842 = vpack.c.b16 %v811, %v810
    %v843 = vpack.c.b16 %v813, %v812
    %v844 = vpack.c.b16 %v815, %v814
    %v845 = vpack.c.b16 %v817, %v816
    %v846 = vpack.c.b16 %v819, %v818
    %v847 = vpack.c.b16 %v821, %v820
    %v848 = vpack.c.b16 %v823, %v822
    %v849 = vpack.c.b16 %v825, %v824
    %v850 = vpack.c.b16 %v827, %v826
    %v851 = vpack.c.b16 %v829, %v828
    %v852 = vpack.c.b16 %v831, %v830
    %v853 = vpack.c.b16 %v833, %v832
    %v854 = vpack.c.b16 %v835, %v834
    %v855 = vpack.c.b16 %v837, %v836
    %v856 = vpack.c.b16 %v839, %v838
    %v857 = vpack.c.b16 %v840, %v840
    %v875 = vsel %vm635, %v497, 0
    %v878 = vsel %vm639, %v857, 0
    %880 = vmatprep.subr.bf16.mxu0 0
    %881 = vmatpush1.bf16.msra.mxu0 %v841
    %882 = vmatprep.subr.bf16.mxu0 0
    %883 = vmatpush1.bf16.msra.mxu0 %v842
    %884 = vmatprep.subr.bf16.mxu0 0
    %885 = vmatpush1.bf16.msra.mxu0 %v843
    %886 = vmatprep.subr.bf16.mxu0 0
    %887 = vmatpush1.bf16.msra.mxu0 %v844
    %888 = vmatprep.subr.bf16.mxu0 0
    %889 = vmatpush1.bf16.msra.mxu0 %v845
    %890 = vmatprep.subr.bf16.mxu0 0
    %891 = vmatpush1.bf16.msra.mxu0 %v846
    %892 = vmatprep.subr.bf16.mxu0 0
    %893 = vmatpush1.bf16.msra.mxu0 %v847
    %894 = vmatprep.subr.bf16.mxu0 0
    %895 = vmatpush1.bf16.msra.mxu0 %v848
    %896 = vmatprep.subr.bf16.mxu0 0
    %897 = vmatpush1.bf16.msra.mxu0 %v849
    %898 = vmatprep.subr.bf16.mxu0 0
    %899 = vmatpush1.bf16.msra.mxu0 %v850
    %900 = vmatprep.subr.bf16.mxu0 0
    %901 = vmatpush1.bf16.msra.mxu0 %v851
    %902 = vmatprep.subr.bf16.mxu0 0
    %903 = vmatpush1.bf16.msra.mxu0 %v852
    %904 = vmatprep.subr.bf16.mxu0 0
    %905 = vmatpush1.bf16.msra.mxu0 %v853
    %906 = vmatprep.subr.bf16.mxu0 0
    %907 = vmatpush1.bf16.msra.mxu0 %v854
    %908 = vmatprep.subr.bf16.mxu0 0
    %909 = vmatpush1.bf16.msra.mxu0 %v855
    %910 = vmatprep.subr.bf16.mxu0 0
    %911 = vmatpush1.bf16.msra.mxu0 %v856
    %912 = vmatprep.mubr.bf16.mxu0 %v496
    %913 = vmatmul.mubr.bf16.gmra.mrb[0].mxu0 %v495
    %v914 = vpop.f32.mrb[0].mxu0
    %v915 = vadd.f32 0.0, %v914
    %v916 = vpop.f32.mrb[0].mxu0
    %v917 = vpop.f32.mrb[0].mxu0
    %v918 = vadd.f32 0.0, %v917
    %v919 = vpop.f32.mrb[0].mxu0
    %920 = vdwg.mxu0
    %921 = vmatprep.subr.bf16.mxu0 0
    %922 = vmatpush1.bf16.msra.mxu0 %v878
    %923 = vmatprep.subr.bf16.mxu0 0
    %924 = vmatpush1.bf16.msra.mxu0 0
    %925 = vmatprep.subr.bf16.mxu0 0
    %926 = vmatpush1.bf16.msra.mxu0 0
    %927 = vmatprep.subr.bf16.mxu0 0
    %928 = vmatpush1.bf16.msra.mxu0 0
    %929 = vmatprep.subr.bf16.mxu0 0
    %930 = vmatpush1.bf16.msra.mxu0 0
    %931 = vmatprep.subr.bf16.mxu0 0
    %932 = vmatpush1.bf16.msra.mxu0 0
    %933 = vmatprep.subr.bf16.mxu0 0
    %934 = vmatpush1.bf16.msra.mxu0 0
    %935 = vmatprep.subr.bf16.mxu0 0
    %936 = vmatpush1.bf16.msra.mxu0 0
    %937 = vmatprep.subr.bf16.mxu0 0
    %938 = vmatpush1.bf16.msra.mxu0 0
    %939 = vmatprep.subr.bf16.mxu0 0
    %940 = vmatpush1.bf16.msra.mxu0 0
    %941 = vmatprep.subr.bf16.mxu0 0
    %942 = vmatpush1.bf16.msra.mxu0 0
    %943 = vmatprep.subr.bf16.mxu0 0
    %944 = vmatpush1.bf16.msra.mxu0 0
    %945 = vmatprep.subr.bf16.mxu0 0
    %946 = vmatpush1.bf16.msra.mxu0 0
    %947 = vmatprep.subr.bf16.mxu0 0
    %948 = vmatpush1.bf16.msra.mxu0 0
    %949 = vmatprep.subr.bf16.mxu0 0
    %950 = vmatpush1.bf16.msra.mxu0 0
    %951 = vmatprep.subr.bf16.mxu0 0
    %952 = vmatpush1.bf16.msra.mxu0 0
    %953 = vmatprep.mubr.bf16.mxu0 0
    %954 = vmatmul.mubr.bf16.gmra.mrb[0].mxu0 %v875
    %v955 = vpop.f32.mrb[0].mxu0
    %v956 = vadd.f32 %v915, %v955
    %v957 = vpop.f32.mrb[0].mxu0
    %v958 = vpop.f32.mrb[0].mxu0
    %v959 = vadd.f32 %v918, %v958
    %v960 = vpop.f32.mrb[0].mxu0
    %961 = vdwg.mxu0
    %v976 = vunpack.c.l.b16 %v728
    %v977 = vunpack.c.l.b16 %v729
    %v978 = vunpack.c.l.b16 %v730
    %v979 = vunpack.c.l.b16 %v731
    %v980 = vunpack.c.l.b16 %v732
    %v981 = vunpack.c.l.b16 %v733
    %v982 = vunpack.c.l.b16 %v734
    %v983 = vunpack.c.l.b16 %v735
    %v984 = vunpack.c.l.b16 %v736
    %v985 = vunpack.c.l.b16 %v737
    %v986 = vunpack.c.l.b16 %v738
    %v987 = vunpack.c.l.b16 %v739
    %v988 = vunpack.c.l.b16 %v740
    %v989 = vunpack.c.l.b16 %v741
    %v990 = vpack.c.b16 %v977, %v976
    %v991 = vpack.c.b16 %v979, %v978
    %v992 = vpack.c.b16 %v981, %v980
    %v993 = vpack.c.b16 %v983, %v982
    %v994 = vpack.c.b16 %v985, %v984
    %v995 = vpack.c.b16 %v987, %v986
    %v996 = vpack.c.b16 %v989, %v988
    %vm1003 = vcmask 900096
    %v1005 = vsel %vm1003, %v727, 0
    %vm1007 = vcmask 1046528
    %v1009 = vsel %vm1007, %v996, 0
    %1011 = vmatprep.subr.bf16.mxu0 0
    %1012 = vmatpush1.bf16.msra.mxu0 %v990
    %1013 = vmatprep.subr.bf16.mxu0 0
    %1014 = vmatpush1.bf16.msra.mxu0 %v991
    %1015 = vmatprep.subr.bf16.mxu0 0
    %1016 = vmatpush1.bf16.msra.mxu0 %v992
    %1017 = vmatprep.subr.bf16.mxu0 0
    %1018 = vmatpush1.bf16.msra.mxu0 %v993
    %1019 = vmatprep.subr.bf16.mxu0 0
    %1020 = vmatpush1.bf16.msra.mxu0 %v994
    %1021 = vmatprep.subr.bf16.mxu0 0
    %1022 = vmatpush1.bf16.msra.mxu0 %v995
    %1023 = vmatprep.subr.bf16.mxu0 0
    %1024 = vmatpush1.bf16.msra.mxu0 %v1009
    %1025 = vmatprep.subr.bf16.mxu0 0
    %1026 = vmatpush1.bf16.msra.mxu0 0
    %1027 = vmatprep.subr.bf16.mxu0 0
    %1028 = vmatpush1.bf16.msra.mxu0 0
    %1029 = vmatprep.subr.bf16.mxu0 0
    %1030 = vmatpush1.bf16.msra.mxu0 0
    %1031 = vmatprep.subr.bf16.mxu0 0
    %1032 = vmatpush1.bf16.msra.mxu0 0
    %1033 = vmatprep.subr.bf16.mxu0 0
    %1034 = vmatpush1.bf16.msra.mxu0 0
    %1035 = vmatprep.subr.bf16.mxu0 0
    %1036 = vmatpush1.bf16.msra.mxu0 0
    %1037 = vmatprep.subr.bf16.mxu0 0
    %1038 = vmatpush1.bf16.msra.mxu0 0
    %1039 = vmatprep.subr.bf16.mxu0 0
    %1040 = vmatpush1.bf16.msra.mxu0 0
    %1041 = vmatprep.subr.bf16.mxu0 0
    %1042 = vmatpush1.bf16.msra.mxu0 0
    %1043 = vmatprep.mubr.bf16.mxu0 0
    %1044 = vmatmul.mubr.bf16.gmra.mrb[0].mxu0 %v1005
    %v1045 = vpop.f32.mrb[0].mxu0
    %v1046 = vadd.f32 %v956, %v1045
    %v1047 = vpop.f32.mrb[0].mxu0
    %v1048 = vpop.f32.mrb[0].mxu0
    %v1049 = vadd.f32 %v959, %v1048
    %v1050 = vpop.f32.mrb[0].mxu0
    %1051 = vdwg.mxu0
    %v1052 = vld [vmem:[#allocation7 + $0x1] sm:$0x1]
    %v1053 = vlaneseq
    %v1054 = vshrl.u32 %v1053, 7
    %v1055 = vsub.s32 0, %v1054
    %v1056 = vrot.slane %v1052, %v1055
    %v1057 = vadd.f32 %v1046, %v1056
    %v1058 = vadd.f32 %v1049, %v1056
    %v1059 = vmax.f32 %v1057, 0.0
    %v1060 = vmax.f32 %v1058, 0.0
    %v1061 = vpack.c.bf16 %v1060, %v1059
    %v1062 = vld [vmem:[#allocation5 + $0x930] sm:$0xf]
    %v1063 = vld [vmem:[#allocation5 + $0x948] sm:$0xf]
    %v1064 = vld [vmem:[#allocation5 + $0x960] sm:$0x3]
    %v1065 = vld [vmem:[#allocation7 + $0x2] sm:$0x1]
    %v1066 = vlaneseq
    %v1067 = vshrl.u32 %v1066, 7
    %v1068 = vsub.s32 0, %v1067
    %v1069 = vrot.slane %v1065, %v1068
    %v1073 = vunpack.c.l.b16 %v1062
    %v1074 = vunpack.c.l.b16 %v1063
    %v1075 = vunpack.c.l.b16 %v1064
    %v1076 = vpack.c.b16 %v1074, %v1073
    %v1077 = vpack.c.b16 %v1075, %v1075
    %vm1079 = vcmask 162816
    %v1081 = vsel %vm1079, %v1061, 0
    %v1084 = vsel %vm639, %v1077, 0
    %1086 = vmatprep.subr.bf16.mxu0 0
    %1087 = vmatpush1.bf16.msra.mxu0 %v1076
    %1088 = vmatprep.subr.bf16.mxu0 0
    %1089 = vmatpush1.bf16.msra.mxu0 %v1084
    %1090 = vmatprep.subr.bf16.mxu0 0
    %1091 = vmatpush1.bf16.msra.mxu0 0
    %1092 = vmatprep.subr.bf16.mxu0 0
    %1093 = vmatpush1.bf16.msra.mxu0 0
    %1094 = vmatprep.subr.bf16.mxu0 0
    %1095 = vmatpush1.bf16.msra.mxu0 0
    %1096 = vmatprep.subr.bf16.mxu0 0
    %1097 = vmatpush1.bf16.msra.mxu0 0
    %1098 = vmatprep.subr.bf16.mxu0 0
    %1099 = vmatpush1.bf16.msra.mxu0 0
    %1100 = vmatprep.subr.bf16.mxu0 0
    %1101 = vmatpush1.bf16.msra.mxu0 0
    %1102 = vmatprep.subr.bf16.mxu0 0
    %1103 = vmatpush1.bf16.msra.mxu0 0
    %1104 = vmatprep.subr.bf16.mxu0 0
    %1105 = vmatpush1.bf16.msra.mxu0 0
    %1106 = vmatprep.subr.bf16.mxu0 0
    %1107 = vmatpush1.bf16.msra.mxu0 0
    %1108 = vmatprep.subr.bf16.mxu0 0
    %1109 = vmatpush1.bf16.msra.mxu0 0
    %1110 = vmatprep.subr.bf16.mxu0 0
    %1111 = vmatpush1.bf16.msra.mxu0 0
    %1112 = vmatprep.subr.bf16.mxu0 0
    %1113 = vmatpush1.bf16.msra.mxu0 0
    %1114 = vmatprep.subr.bf16.mxu0 0
    %1115 = vmatpush1.bf16.msra.mxu0 0
    %1116 = vmatprep.subr.bf16.mxu0 0
    %1117 = vmatpush1.bf16.msra.mxu0 0
    %1118 = vmatprep.mubr.bf16.mxu0 0
    %1119 = vmatmul.mubr.bf16.gmra.mrb[0].mxu0 %v1081
    %v1120 = vpop.f32.mrb[0].mxu0
    %v1121 = vadd.f32 %v1069, %v1120
    %v1122 = vpop.f32.mrb[0].mxu0
    %v1123 = vpop.f32.mrb[0].mxu0
    %v1124 = vadd.f32 %v1069, %v1123
    %v1125 = vpop.f32.mrb[0].mxu0
    %1126 = vdwg.mxu0
    %1127 = vmax.xlane.f32.xlu0 %v1121
    %v1128 = vpop.xlane.xlu0 %1127
    %1129 = vmax.xlane.f32.xlu0 %v1124
    %v1130 = vpop.xlane.xlu0 %1129
    %v1131 = vsub.f32 %v1121, %v1128
    %v1132 = vsub.f32 %v1124, %v1130
    %v1133 = vmul.f32 %v1131, 1.442695
    %v1134 = vpow.pop %v1133
    %v1135 = vmul.f32 %v1132, 1.442695
    %v1136 = vpow.pop %v1135
    %1137 = vadd.xlane.f32.xlu0 %v1134
    %v1138 = vpop.xlane.xlu0 %1137
    %1139 = vadd.xlane.f32.xlu0 %v1136
    %v1140 = vpop.xlane.xlu0 %1139
    %v1141 = vrcp.pop %v1138
    %v1142 = vrcp.pop %v1140
    %v1143 = vmul.f32 %v1134, %v1141
    %v1144 = vmul.f32 %v1136, %v1142
    %1145 = vst [vmem:[#allocation8] sm:$0xff] %v1143
    %1146 = vst [vmem:[#allocation8 + $0x8] sm:$0xff] %v1144
    // Predicated region
    $region26: #{tpu_custom_call.1} parent=1 // pred_check
      _
    $region27: #{tpu_custom_call.1} parent=1 // pred_check_branch
      %1148 = sbr.rel (0) target = $region29
    $region28: #{tpu_custom_call.1} parent=1 // pred_region
      %s1150 = ssub.s32 256, 256
      %1151 = vsyncadd [#allocation4], %s1150
      %s1152 = sshll.u32 [#allocation8], 4
      %s1153 = int_to_ptr.vmem [resolvable:$true] %s1152
      %1158 = dma.vmem_to_hbm [thread:$0]  %s1153, 256, %s3, [#allocation4], 128, 128, 8
    $region29: #{tpu_custom_call.1} parent=1 // pred_fallthru
      _
    // Predicated region
    $region30: #{tpu_custom_call.1} parent=1 // pred_check
      _
    $region31: #{tpu_custom_call.1} parent=1 // pred_check_branch
      %1160 = sbr.rel (0) target = $region33
    $region32: #{tpu_custom_call.1} parent=1 // pred_region
      %1161 = dma.done [#allocation4], 256
    $region33: #{tpu_custom_call.1} parent=1 // pred_fallthru
      _
    %1162 = vsyncpa [#allocation3], 1
    %1163 = vsyncpa [#allocation6], 1
    %1164 = vsyncpa [#allocation4], 1

</llo_original>
